<compile_context>
chip_gen: v7x
topology: tpu7x:2x2x1
jax: 0.10.0
libtpu: 0.0.40
codegen_flags: <defaults>
</compile_context>

<pallas_src>
import jax
import jax.numpy as jnp
from jax.experimental import pallas as pl
from jax.experimental.pallas import tpu as pltpu

OUT_DIM = 10       # MNIST classes
PAD_OUT = 128      # lane-dense padded output width (zero columns 10..127)
_MIN_TILE = 16     # batch-tile granularity (covers bf16 sublane packing, f32's 8)


def _round_up(x: int, m: int) -> int:
    return ((x + m - 1) // m) * m


def _linear_kernel(x_ref, w_ref, b_ref, o_ref):
    # x_ref: [TB, in_dim], w_ref: [in_dim, PAD_OUT], b_ref: [1, PAD_OUT] (f32),
    # o_ref: [TB, PAD_OUT]
    y = jnp.dot(x_ref[...], w_ref[...], preferred_element_type=jnp.float32)
    o_ref[...] = (y + b_ref[...]).astype(o_ref.dtype)


def prepare_head_params(weight, bias, param_dtype=None):
    """One-time param prep (call once at init, NOT per forward).

    weight: [10, in_dim]  (PyTorch nn.Linear convention)
    bias:   [10]
    param_dtype: compute dtype for the weight (e.g. jnp.bfloat16 to halve the
      dominant HBM read); defaults to weight.dtype.
    Returns (wt_padded [in_dim, 128], bias_padded [1, 128] f32); padded columns
    are exact zeros so sliced logits are unaffected.
    """
    out_dim, in_dim = weight.shape
    assert out_dim == OUT_DIM
    if param_dtype is None:
        param_dtype = weight.dtype
    wt = (jnp.zeros((in_dim, PAD_OUT), param_dtype)
          .at[:, :OUT_DIM].set(weight.astype(param_dtype).T))
    b2 = (jnp.zeros((1, PAD_OUT), jnp.float32)
          .at[:, :OUT_DIM].set(bias.astype(jnp.float32)))
    return wt, b2


def _choose_batch_tile(B, in_dim, x_itemsize, out_itemsize, tb_cap):
    """Pick the batch tile size TB (multiple of 16, or == B for small batches)."""
    # Target ~2 MiB x-tile per grid step so DMA amortizes the ~0.35us step cost,
    # clamped to [512, tb_cap].
    tb = max(512, (2 << 20) // max(1, in_dim * x_itemsize))
    tb = min(tb, max(_MIN_TILE, tb_cap))
    # Keep double-buffered x + out tiles (plus resident weight/bias, counted
    # conservatively as double-buffered f32) under ~32 MiB of pipeline VMEM.
    per_row = 2 * (in_dim * x_itemsize + PAD_OUT * out_itemsize)
    resident = 2 * (in_dim + 1) * PAD_OUT * 4
    vmem_rows = max(_MIN_TILE, ((32 << 20) - resident) // max(1, per_row))
    tb = min(tb, vmem_rows)
    # Guarantee >=2 grid steps when the batch can be split: lets the "parallel"
    # batch axis use both v7x TensorCores and gives the auto-pipeline real
    # DMA/compute overlap.
    if B >= 2 * _MIN_TILE:
        tb = min(tb, _round_up(pl.cdiv(B, 2), _MIN_TILE))
    tb = _round_up(tb, _MIN_TILE)
    return B if tb >= B else tb


def head_mnist_forward(x, wt_padded, bias_padded, *, tb_cap=2048,
                       return_padded=False):
    """Pallas forward for nn.Linear(in_dim, 10).

    Args:
      x:            [B, in_dim] (f32 or bf16)
      wt_padded:    [in_dim, 128] from prepare_head_params
      bias_padded:  [1, 128] (f32) from prepare_head_params
      tb_cap:       upper bound on the batch tile size
      return_padded: if True, return the lane-dense zero-padded (B, 128) logits
        directly (columns 10..127 are exact zeros) and skip the extra HBM slice
        pass; use this when the consumer (softmax/argmax/CE) can handle it.
    Returns:
      [B, 10] logits (or [B, 128] if return_padded) in x's original dtype.
    """
    B, in_dim = x.shape
    assert wt_padded.shape == (in_dim, PAD_OUT)
    assert bias_padded.shape == (1, PAD_OUT)

    out_dtype = x.dtype
    if x.dtype != wt_padded.dtype:
        # Match the compute dtype chosen at init (bf16 weights -> bf16 x halves
        # the dominant HBM read); MXU still accumulates in f32.
        x = x.astype(wt_padded.dtype)

    x_is = jnp.dtype(x.dtype).itemsize
    w_is = jnp.dtype(wt_padded.dtype).itemsize
    o_is = jnp.dtype(out_dtype).itemsize

    TB = _choose_batch_tile(B, in_dim, x_is, o_is, tb_cap)
    grid = (pl.cdiv(B, TB),)

    # Explicit VMEM limit: double-buffered x/out tiles + resident weight/bias,
    # with 2x margin, clamped to [32 MiB, 48 MiB] (under v7x's 64 MiB physical,
    # above v5e's 16 MiB scoped default).
    need = (2 * TB * in_dim * x_is + 2 * TB * PAD_OUT * o_is
            + 2 * (in_dim + 1) * PAD_OUT * max(w_is, 4))
    vmem_limit_bytes = int(min(max(2 * need, 32 << 20), 48 << 20))

    cost = pl.CostEstimate(
        flops=2 * B * in_dim * PAD_OUT,
        bytes_accessed=(B * in_dim * x_is + in_dim * PAD_OUT * w_is
                        + B * PAD_OUT * o_is),
        transcendentals=0,
    )

    # TODO(synk): for extremely large in_dim (resident weight approaching the
    # VMEM budget), add a K grid axis with an f32 accumulator scratch instead
    # of shrinking TB further.
    out_padded = pl.pallas_call(
        _linear_kernel,
        out_shape=jax.ShapeDtypeStruct((B, PAD_OUT), out_dtype),
        grid_spec=pltpu.PrefetchScalarGridSpec(
            num_scalar_prefetch=0,
            grid=grid,
            in_specs=[
                pl.BlockSpec((TB, in_dim), lambda i: (i, 0)),        # x tile
                pl.BlockSpec((in_dim, PAD_OUT), lambda i: (0, 0)),   # weight (resident)
                pl.BlockSpec((1, PAD_OUT), lambda i: (0, 0)),        # bias (resident)
            ],
            out_specs=pl.BlockSpec((TB, PAD_OUT), lambda i: (i, 0)),
        ),
        compiler_params=pltpu.CompilerParams(
            dimension_semantics=("parallel",),   # megacore-shard batch on v7x
            vmem_limit_bytes=vmem_limit_bytes,
        ),
        cost_estimate=cost,
    )(x, wt_padded, bias_padded)

    if return_padded:
        return out_padded
    return out_padded[:, :OUT_DIM]


if __name__ == "__main__":
    key = jax.random.PRNGKey(0)
    k_x, k_w, k_b, k_x2, k_x3 = jax.random.split(key, 5)

    in_dim = 32
    bound = 1.0 / (in_dim ** 0.5)
    weight = jax.random.uniform(k_w, (OUT_DIM, in_dim), jnp.float32, -bound, bound)
    bias = jax.random.uniform(k_b, (OUT_DIM,), jnp.float32, -bound, bound)

    # Param prep happens once (init time), not per forward.
    wt_f32, b_pad = prepare_head_params(weight, bias)

    # --- Test 1: small batch, single block, f32 -----------------------------
    x1 = jax.random.normal(k_x, (8, in_dim), jnp.float32)
    out1 = jax.block_until_ready(head_mnist_forward(x1, wt_f32, b_pad))
    ref1 = x1 @ weight.T + bias
    assert out1.shape == (8, OUT_DIM)
    assert jnp.allclose(out1, ref1, atol=1e-5, rtol=1e-5)

    # --- Test 2: multi-block grid + ragged last block (B % TB != 0) ---------
    x2 = jax.random.normal(k_x2, (40, in_dim), jnp.float32)
    out2 = jax.block_until_ready(head_mnist_forward(x2, wt_f32, b_pad, tb_cap=16))
    ref2 = x2 @ weight.T + bias
    assert out2.shape == (40, OUT_DIM)
    assert jnp.allclose(out2, ref2, atol=1e-5, rtol=1e-5)

    # --- Test 3: bf16 weights/activations, padded lane-dense output ---------
    wt_bf16, b_pad2 = prepare_head_params(weight, bias, param_dtype=jnp.bfloat16)
    x3 = jax.random.normal(k_x3, (32, in_dim), jnp.float32).astype(jnp.bfloat16)
    out3 = jax.block_until_ready(
        head_mnist_forward(x3, wt_bf16, b_pad2, return_padded=True))
    ref3 = (x3.astype(jnp.float32) @ wt_bf16.astype(jnp.float32) + b_pad2)
    assert out3.shape == (32, PAD_OUT)
    assert jnp.allclose(out3[:, OUT_DIM:].astype(jnp.float32), 0.0)
    assert jnp.allclose(out3.astype(jnp.float32),
                        ref3.astype(jnp.bfloat16).astype(jnp.float32),
                        atol=5e-2, rtol=5e-2)

    print("KERNEL_OK")
</pallas_src>

<mosaic_0001>
module attributes {stable_mosaic.version = 11 : i64} {
  func.func @_linear_kernel(%arg0: i32, %arg1: memref<8x32xf32, #tpu.memory_space<vmem>>, %arg2: memref<32x128xf32, #tpu.memory_space<vmem>>, %arg3: memref<1x128xf32, #tpu.memory_space<vmem>>, %arg4: memref<8x128xf32, #tpu.memory_space<vmem>>) attributes {dimension_semantics = [#tpu.dimension_semantics<parallel>], iteration_bounds = array<i64: 1>, scalar_prefetch = 0 : i64, scratch_operands = 0 : i64, tpu.core_type = #tpu.core_type<tc>, window_params = [{transform_indices = @transform_0, window_bounds = array<i64: 8, 32>}, {pipeline_mode = #tpu.pipeline_mode<synchronous>, transform_indices = @transform_1, window_bounds = array<i64: 32, 128>}, {pipeline_mode = #tpu.pipeline_mode<synchronous>, transform_indices = @transform_2, window_bounds = array<i64: 1, 128>}, {transform_indices = @transform_3, window_bounds = array<i64: 8, 128>}]} {
    %c0 = arith.constant 0 : index
    %c0_0 = arith.constant 0 : index
    %0 = vector.load %arg1[%c0, %c0_0] : memref<8x32xf32, #tpu.memory_space<vmem>>, vector<8x32xf32>
    %c0_1 = arith.constant 0 : index
    %c0_2 = arith.constant 0 : index
    %1 = vector.load %arg2[%c0_1, %c0_2] : memref<32x128xf32, #tpu.memory_space<vmem>>, vector<32x128xf32>
    %cst = arith.constant dense<0.000000e+00> : vector<8x128xf32>
    %2 = tpu.matmul %0, %1, %cst {dimension_numbers = #tpu.dot_dimension_numbers<[1], [0], [0], [1], [0, 0, 1, 1], [], []>} : vector<8x32xf32>, vector<32x128xf32>, vector<8x128xf32> -> vector<8x128xf32>
    %c0_3 = arith.constant 0 : index
    %c0_4 = arith.constant 0 : index
    %3 = vector.load %arg3[%c0_3, %c0_4] : memref<1x128xf32, #tpu.memory_space<vmem>>, vector<1x128xf32>
    %4 = vector.broadcast %3 : vector<1x128xf32> to vector<8x128xf32>
    %5 = arith.addf %2, %4 : vector<8x128xf32>
    %c0_5 = arith.constant 0 : index
    %c0_6 = arith.constant 0 : index
    %6 = vector.load %arg4[%c0_5, %c0_6] : memref<8x128xf32, #tpu.memory_space<vmem>>, vector<8x128xf32>
    tpu.vector_store %arg4[%c0_5, %c0_6], %5 {strides = array<i32>} : memref<8x128xf32, #tpu.memory_space<vmem>>, vector<8x128xf32>,
    return
  }
  func.func @transform_0(%arg0: i32) -> (i32, i32) {
    %c0_i32 = arith.constant 0 : i32
    %c0_i32_0 = arith.constant 0 : i32
    return %arg0, %c0_i32 : i32, i32
  }
  func.func @transform_1(%arg0: i32) -> (i32, i32) {
    %c0_i32 = arith.constant 0 : i32
    %c0_i32_0 = arith.constant 0 : i32
    %c0_i32_1 = arith.constant 0 : i32
    return %c0_i32, %c0_i32_0 : i32, i32
  }
  func.func @transform_2(%arg0: i32) -> (i32, i32) {
    %c0_i32 = arith.constant 0 : i32
    %c0_i32_0 = arith.constant 0 : i32
    %c0_i32_1 = arith.constant 0 : i32
    return %c0_i32, %c0_i32_0 : i32, i32
  }
  func.func @transform_3(%arg0: i32) -> (i32, i32) {
    %c0_i32 = arith.constant 0 : i32
    %c0_i32_0 = arith.constant 0 : i32
    return %arg0, %c0_i32 : i32, i32
  }
}

</mosaic_0001>

<llo_original>
// kernel: tpu_custom_call.1
$region0: #{tpu_custom_call.1}
  #allocation0 [shape = 'u32[]', space=smem, size = 0x4, offset = 0x4, fixed_abs, tag = 'smem constant byte address 0x4 - core index']
  #allocation1 [shape = 'u32[144,128]{1,0:T(1,128)}', space=vmem, size = 0x12000, scoped, tag = 'internal scratch']
  %s0 = inlined_call_operand.hbm [shape: f32[8,32], index: 0, kind: input, shape index: {}]
  %s1 = inlined_call_operand.hbm [shape: f32[32,128], index: 1, kind: input, shape index: {}]
  %s2 = inlined_call_operand.vmem [shape: f32[1,128], index: 2, kind: input, shape index: {}]
  %s3 = inlined_call_operand.hbm [shape: f32[8,128], index: 3, kind: output, shape index: {}]
  %s4 = sld [smem:[#allocation0]]
  $region30: #{tpu_custom_call.1} parent=0
    _
  %s6 = ssub.s32 1, %s4
  %s7 = scalar_select 0, %s6, %s4
  $region1: #{tpu_custom_call.1} parent=0
    #allocation2 [shape = 'u8[4096]{0}', space=vmem, size = 0x1000, scoped, tag = 'input window, operand 0, single buffered']
    #allocation3 [shape = 's32[1]{0}', space=sflag, size = 0x4, scoped, tag = 'scoped memory for tpu_custom_call.1']
    #allocation4 [shape = 's32[1]{0}', space=sflag, size = 0x4, scoped, tag = 'scoped memory for tpu_custom_call.1']
    #allocation5 [shape = 'u8[16384]{0}', space=vmem, size = 0x4000, scoped, tag = 'input window, operand 1, single buffered']
    #allocation6 [shape = 's32[1]{0}', space=sflag, size = 0x4, scoped, tag = 'scoped memory for tpu_custom_call.1']
    #allocation7 [shape = 'u8[4096]{0}', space=vmem, size = 0x1000, scoped, tag = 'output window, operand 0, single buffered']
    %8 = vsyncpa [#allocation3], 0
    %9 = vsyncpa [#allocation6], 0
    %10 = vsyncpa [#allocation4], 0
    // Predicated region
    $region2: #{tpu_custom_call.1} parent=1 // pred_check
      _
    $region3: #{tpu_custom_call.1} parent=1 // pred_check_branch
      %12 = sbr.rel (0) target = $region5
    $region4: #{tpu_custom_call.1} parent=1 // pred_region
      %s14 = ssub.s32 128, 128
      %15 = vsyncadd [#allocation3], %s14
      %s17 = sshll.u32 [#allocation2], 4
      %s18 = int_to_ptr.vmem [resolvable:$true] %s17
      %20 = dma.hbm_to_vmem [thread:$0]  %s0, 128, %s18, [#allocation3]
    $region5: #{tpu_custom_call.1} parent=1 // pred_fallthru
      _
    // Predicated region
    $region6: #{tpu_custom_call.1} parent=1 // pred_check
      _
    $region7: #{tpu_custom_call.1} parent=1 // pred_check_branch
      %22 = sbr.rel (0) target = $region9
    $region8: #{tpu_custom_call.1} parent=1 // pred_region
      %s24 = ssub.s32 512, 512
      %25 = vsyncadd [#allocation6], %s24
      %s26 = sshll.u32 [#allocation5], 4
      %s27 = int_to_ptr.vmem [resolvable:$true] %s26
      %32 = dma.hbm_to_vmem [thread:$0]  %s1, 512, %s27, [#allocation6], 128, 128, 8
    $region9: #{tpu_custom_call.1} parent=1 // pred_fallthru
      _
    // Predicated region
    $region10: #{tpu_custom_call.1} parent=1 // pred_check
      _
    $region11: #{tpu_custom_call.1} parent=1 // pred_check_branch
      %34 = sbr.rel (0) target = $region13
    $region12: #{tpu_custom_call.1} parent=1 // pred_region
      _
    $region13: #{tpu_custom_call.1} parent=1 // pred_fallthru
      _
    // Predicated region
    $region14: #{tpu_custom_call.1} parent=1 // pred_check
      _
    $region15: #{tpu_custom_call.1} parent=1 // pred_check_branch
      %36 = sbr.rel (0) target = $region17
    $region16: #{tpu_custom_call.1} parent=1 // pred_region
      %37 = dma.done [#allocation3], 128
    $region17: #{tpu_custom_call.1} parent=1 // pred_fallthru
      _
    // Predicated region
    $region18: #{tpu_custom_call.1} parent=1 // pred_check
      _
    $region19: #{tpu_custom_call.1} parent=1 // pred_check_branch
      %39 = sbr.rel (0) target = $region21
    $region20: #{tpu_custom_call.1} parent=1 // pred_region
      %40 = dma.done [#allocation6], 512
    $region21: #{tpu_custom_call.1} parent=1 // pred_fallthru
      _
    %v41 = vld [vmem:[#allocation2] sm:$0xff]
    %v42 = vld [vmem:[#allocation5] sm:$0xff]
    %v43 = vld [vmem:[#allocation5 + $0x8] sm:$0xff]
    %v44 = vld [vmem:[#allocation5 + $0x10] sm:$0xff]
    %v45 = vld [vmem:[#allocation5 + $0x18] sm:$0xff]
    %v46 = vld [vmem:[%s2] sm:$0x1]
    %v48 = vlaneseq
    %v49 = vshrl.u32 %v48, 7
    %v50 = vsub.s32 0, %v49
    %v51 = vrot.slane %v46, %v50
    %vm53 = vcmask 261120
    %v55 = vsel %vm53, %v41, 0
    %57 = vmatprep.subr.mxu0 0.0
    %58 = vmatpush1.msra.mxu0 %v42
    %59 = vmatprep.subr.mxu0 0.0
    %60 = vmatpush1.msra.mxu0 %v43
    %61 = vmatprep.subr.mxu0 0.0
    %62 = vmatpush1.msra.mxu0 %v44
    %63 = vmatprep.subr.mxu0 0.0
    %64 = vmatpush1.msra.mxu0 %v45
    %65 = vmatprep.subr.mxu0 0.0
    %66 = vmatpush1.msra.mxu0 0.0
    %67 = vmatprep.subr.mxu0 0.0
    %68 = vmatpush1.msra.mxu0 0.0
    %69 = vmatprep.subr.mxu0 0.0
    %70 = vmatpush1.msra.mxu0 0.0
    %71 = vmatprep.subr.mxu0 0.0
    %72 = vmatpush1.msra.mxu0 0.0
    %73 = vmatprep.subr.mxu0 0.0
    %74 = vmatpush1.msra.mxu0 0.0
    %75 = vmatprep.subr.mxu0 0.0
    %76 = vmatpush1.msra.mxu0 0.0
    %77 = vmatprep.subr.mxu0 0.0
    %78 = vmatpush1.msra.mxu0 0.0
    %79 = vmatprep.subr.mxu0 0.0
    %80 = vmatpush1.msra.mxu0 0.0
    %81 = vmatprep.subr.mxu0 0.0
    %82 = vmatpush1.msra.mxu0 0.0
    %83 = vmatprep.subr.mxu0 0.0
    %84 = vmatpush1.msra.mxu0 0.0
    %85 = vmatprep.subr.mxu0 0.0
    %86 = vmatpush1.msra.mxu0 0.0
    %87 = vmatprep.subr.mxu0 0.0
    %88 = vmatpush1.msra.mxu0 0.0
    %89 = vmatprep.subr.mxu0 0.0
    %90 = vmatpush1.msra.mxu0 0.0
    %91 = vmatprep.subr.mxu0 0.0
    %92 = vmatpush1.msra.mxu0 0.0
    %93 = vmatprep.subr.mxu0 0.0
    %94 = vmatpush1.msra.mxu0 0.0
    %95 = vmatprep.subr.mxu0 0.0
    %96 = vmatpush1.msra.mxu0 0.0
    %97 = vmatprep.subr.mxu0 0.0
    %98 = vmatpush1.msra.mxu0 0.0
    %99 = vmatprep.subr.mxu0 0.0
    %100 = vmatpush1.msra.mxu0 0.0
    %101 = vmatprep.subr.mxu0 0.0
    %102 = vmatpush1.msra.mxu0 0.0
    %103 = vmatprep.subr.mxu0 0.0
    %104 = vmatpush1.msra.mxu0 0.0
    %105 = vmatprep.subr.mxu0 0.0
    %106 = vmatpush1.msra.mxu0 0.0
    %107 = vmatprep.subr.mxu0 0.0
    %108 = vmatpush1.msra.mxu0 0.0
    %109 = vmatprep.subr.mxu0 0.0
    %110 = vmatpush1.msra.mxu0 0.0
    %111 = vmatprep.subr.mxu0 0.0
    %112 = vmatpush1.msra.mxu0 0.0
    %113 = vmatprep.subr.mxu0 0.0
    %114 = vmatpush1.msra.mxu0 0.0
    %115 = vmatprep.subr.mxu0 0.0
    %116 = vmatpush1.msra.mxu0 0.0
    %117 = vmatprep.subr.mxu0 0.0
    %118 = vmatpush1.msra.mxu0 0.0
    %119 = vmatprep.subr.mxu0 0.0
    %120 = vmatpush1.msra.mxu0 0.0
    %121 = vmatprep.mubr.f32.mxu0 0.0
    %122 = vmatmul.mubr.f32.gmra.mrb[0].mxu0 %v55
    %v123 = vpop.f32.mrb[0].mxu0
    %v124 = vadd.f32 %v51, %v123
    %v125 = vpop.f32.mrb[0].mxu0
    %126 = vdwg.mxu0
    %127 = vst [vmem:[#allocation7] sm:$0xff] %v124
    // Predicated region
    $region22: #{tpu_custom_call.1} parent=1 // pred_check
      _
    $region23: #{tpu_custom_call.1} parent=1 // pred_check_branch
      %129 = sbr.rel (0) target = $region25
    $region24: #{tpu_custom_call.1} parent=1 // pred_region
      %s131 = ssub.s32 128, 128
      %132 = vsyncadd [#allocation4], %s131
      %s134 = sshll.u32 [#allocation7], 4
      %s135 = int_to_ptr.vmem [resolvable:$true] %s134
      %137 = dma.vmem_to_hbm [thread:$0]  %s135, 128, %s3, [#allocation4]
    $region25: #{tpu_custom_call.1} parent=1 // pred_fallthru
      _
    // Predicated region
    $region26: #{tpu_custom_call.1} parent=1 // pred_check
      _
    $region27: #{tpu_custom_call.1} parent=1 // pred_check_branch
      %139 = sbr.rel (0) target = $region29
    $region28: #{tpu_custom_call.1} parent=1 // pred_region
      %140 = dma.done [#allocation4], 128
    $region29: #{tpu_custom_call.1} parent=1 // pred_fallthru
      _
    %141 = vsyncpa [#allocation3], 1
    %142 = vsyncpa [#allocation6], 1
    %143 = vsyncpa [#allocation4], 1

</llo_original>
